<compile_context>
chip_gen: v5e
topology: v5e:2x2
jax: 0.10.0
libtpu: 0.0.40
codegen_flags: <defaults>
</compile_context>

<pallas_src>
import jax
import jax.numpy as jnp
from jax.experimental import pallas as pl
from jax.experimental.pallas import tpu as pltpu

LN_EPS = 1e-5


def _round_up(a, b):
    return (a + b - 1) // b * b


def _ff_kernel(x_ref, gamma_ref, beta_ref, wv_ref, wg_ref, wd_ref, o_ref,
               xn_ref, acc_ref):
    # grid = (row_tiles, hidden_tiles); hidden axis is the reduction (innermost).
    j = pl.program_id(1)

    @pl.when(j == 0)
    def _():
        # LayerNorm in f32 on the (tm, dim) tile, computed once per row tile.
        x = x_ref[...].astype(jnp.float32)
        mean = jnp.mean(x, axis=-1, keepdims=True)
        c = x - mean
        var = jnp.mean(c * c, axis=-1, keepdims=True)
        xn = c * jax.lax.rsqrt(var + LN_EPS)
        xn = xn * gamma_ref[...] + beta_ref[...]          # gamma/beta already f32
        xn_ref[...] = xn.astype(xn_ref.dtype)             # matmul input dtype (no weight upcast)
        acc_ref[...] = jnp.zeros_like(acc_ref)

    xn = xn_ref[...]
    # Up projection for this hidden tile: value half and gate half, f32 MXU accumulate.
    hv = jnp.dot(xn, wv_ref[...], preferred_element_type=jnp.float32)
    hg = jnp.dot(xn, wg_ref[...], preferred_element_type=jnp.float32)
    # swiglu in f32 (VPU/EUP); sigmoid stays f32 (v5e has no bf16 VPU/EUP path).
    act = hv * (hg * jax.nn.sigmoid(hg))
    # Down projection partial product accumulated into the f32 scratch.
    acc_ref[...] += jnp.dot(act.astype(wd_ref.dtype), wd_ref[...],
                            preferred_element_type=jnp.float32)

    @pl.when(j == pl.num_programs(1) - 1)
    def _():
        o_ref[...] = acc_ref[...].astype(o_ref.dtype)


def feed_forward_pallas(x, gamma, beta, w_up, w_down, *, tm=256, th=512,
                        vmem_limit_bytes=None):
    """FeedForward forward pass.

    x: (..., dim). gamma/beta: (dim,). w_up: (dim, 2*hidden) stored (in, out).
    w_down: (hidden, dim) stored (in, out).
    tm: row tile (use 256 on v6e/v7x, 128 on v5e). th: hidden tile (lane-aligned).
    """
    orig_shape = x.shape
    dim = orig_shape[-1]
    rows = 1
    for s in orig_shape[:-1]:
        rows *= int(s)
    x2 = x.reshape(rows, dim)

    two_hidden = w_up.shape[1]
    hidden = two_hidden // 2
    # Split up-proj into contiguous value / gate halves so a hidden tile needs a
    # single contiguous column block of each half.
    w_val = w_up[:, :hidden]
    w_gate = w_up[:, hidden:]

    compute_dtype = w_up.dtype  # matmul input dtype (keep bf16 weights as bf16)

    # Row tile: MXU-sized, but never larger than the (8-rounded) row count.
    tm_eff = min(tm, _round_up(rows, 8))
    rows_p = _round_up(rows, tm_eff)
    if rows_p != rows:
        x2 = jnp.pad(x2, ((0, rows_p - rows), (0, 0)))

    # Hidden tile: full hidden if small, else th with zero padding (padded gate
    # columns give silu(0)=0 and padded w_down rows are 0, so padding is exact).
    if hidden <= th:
        th_eff = hidden
        hidden_p = hidden
    else:
        th_eff = th
        hidden_p = _round_up(hidden, th_eff)
    if hidden_p != hidden:
        pad_h = hidden_p - hidden
        w_val = jnp.pad(w_val, ((0, 0), (0, pad_h)))
        w_gate = jnp.pad(w_gate, ((0, 0), (0, pad_h)))
        w_down = jnp.pad(w_down, ((0, pad_h), (0, 0)))

    # Hoist gamma/beta casts out of the per-tile hot path.
    gamma2 = gamma.reshape(1, dim).astype(jnp.float32)
    beta2 = beta.reshape(1, dim).astype(jnp.float32)

    n_row = rows_p // tm_eff
    n_hid = hidden_p // th_eff

    cp_kwargs = dict(dimension_semantics=("parallel", "arbitrary"))
    if vmem_limit_bytes is not None:
        cp_kwargs["vmem_limit_bytes"] = vmem_limit_bytes

    # TODO(synk): if dim < 128 in production, pack rows so stores are lane-dense.
    out = pl.pallas_call(
        _ff_kernel,
        out_shape=jax.ShapeDtypeStruct((rows_p, dim), x.dtype),
        grid_spec=pltpu.PrefetchScalarGridSpec(
            num_scalar_prefetch=0,
            grid=(n_row, n_hid),
            in_specs=[
                pl.BlockSpec((tm_eff, dim), lambda i, j: (i, 0)),    # x row tile
                pl.BlockSpec((1, dim), lambda i, j: (0, 0)),         # gamma (f32)
                pl.BlockSpec((1, dim), lambda i, j: (0, 0)),         # beta (f32)
                pl.BlockSpec((dim, th_eff), lambda i, j: (0, j)),    # up-proj value columns
                pl.BlockSpec((dim, th_eff), lambda i, j: (0, j)),    # up-proj gate columns
                pl.BlockSpec((th_eff, dim), lambda i, j: (j, 0)),    # down-proj rows
            ],
            out_specs=pl.BlockSpec((tm_eff, dim), lambda i, j: (i, 0)),
            scratch_shapes=[
                pltpu.VMEM((tm_eff, dim), compute_dtype),   # cached LN output
                pltpu.VMEM((tm_eff, dim), jnp.float32),     # f32 accumulator
            ],
        ),
        compiler_params=pltpu.CompilerParams(**cp_kwargs),
    )(x2, gamma2, beta2, w_val, w_gate, w_down)

    if rows_p != rows:
        out = out[:rows]
    return out.reshape(orig_shape)


def feed_forward_ref(x, gamma, beta, w_up, w_down):
    xf = x.astype(jnp.float32)
    mean = jnp.mean(xf, axis=-1, keepdims=True)
    var = jnp.mean((xf - mean) ** 2, axis=-1, keepdims=True)
    xn = (xf - mean) * jax.lax.rsqrt(var + LN_EPS)
    xn = xn * gamma.astype(jnp.float32) + beta.astype(jnp.float32)
    h = xn @ w_up.astype(jnp.float32)
    hidden = w_up.shape[1] // 2
    val, gate = h[..., :hidden], h[..., hidden:]
    act = val * (gate * jax.nn.sigmoid(gate))
    return (act @ w_down.astype(jnp.float32)).astype(x.dtype)


if __name__ == "__main__":
    key = jax.random.PRNGKey(0)
    k1, k2, k3, k4 = jax.random.split(key, 4)

    # --- Small shapes consistent with the module: tokens (batch=2, seq=8), dim=32, hidden=32.
    batch, seq, dim, hidden = 2, 8, 32, 32
    x = jax.random.normal(k1, (batch, seq, dim), jnp.float32)
    gamma = jnp.ones((dim,), jnp.float32)            # nn.LayerNorm weight
    beta = jnp.zeros((dim,), jnp.float32)            # nn.LayerNorm bias
    w_up = jax.random.normal(k2, (dim, 2 * hidden), jnp.float32) / jnp.sqrt(dim)
    # The module zero-inits w_down; use nonzero values here so the MXU path is checked.
    w_down = jax.random.normal(k3, (hidden, dim), jnp.float32) / jnp.sqrt(hidden)

    out = jax.block_until_ready(feed_forward_pallas(x, gamma, beta, w_up, w_down))
    ref = feed_forward_ref(x, gamma, beta, w_up, w_down)
    assert out.shape == x.shape
    assert jnp.allclose(out, ref, atol=2e-2, rtol=2e-2), \
        float(jnp.max(jnp.abs(out - ref)))

    # --- Second case exercising row padding (ragged rows) and hidden-tile accumulation.
    q1, q2, q3, q4, q5 = jax.random.split(k4, 5)
    b2, s2, d2, h2 = 2, 120, 256, 384   # rows=240 (not a multiple of tm), 3 hidden tiles
    x2 = jax.random.normal(q1, (b2, s2, d2), jnp.float32)
    g2 = 1.0 + 0.1 * jax.random.normal(q2, (d2,), jnp.float32)
    be2 = 0.1 * jax.random.normal(q3, (d2,), jnp.float32)
    wu2 = jax.random.normal(q4, (d2, 2 * h2), jnp.float32) / jnp.sqrt(d2)
    wd2 = jax.random.normal(q5, (h2, d2), jnp.float32) / jnp.sqrt(h2)

    out2 = jax.block_until_ready(
        feed_forward_pallas(x2, g2, be2, wu2, wd2, tm=128, th=128))
    ref2 = feed_forward_ref(x2, g2, be2, wu2, wd2)
    assert out2.shape == x2.shape
    assert jnp.allclose(out2, ref2, atol=3e-2, rtol=3e-2), \
        float(jnp.max(jnp.abs(out2 - ref2)))

    print("KERNEL_OK")
</pallas_src>

<mosaic_0001>
module attributes {stable_mosaic.version = 11 : i64} {
  func.func @_ff_kernel(%arg0: i32, %arg1: i32, %arg2: memref<16x32xf32, #tpu.memory_space<vmem>>, %arg3: memref<1x32xf32, #tpu.memory_space<vmem>>, %arg4: memref<1x32xf32, #tpu.memory_space<vmem>>, %arg5: memref<32x32xf32, #tpu.memory_space<vmem>>, %arg6: memref<32x32xf32, #tpu.memory_space<vmem>>, %arg7: memref<32x32xf32, #tpu.memory_space<vmem>>, %arg8: memref<16x32xf32, #tpu.memory_space<vmem>>, %arg9: memref<16x32xf32, #tpu.memory_space<vmem>>, %arg10: memref<16x32xf32, #tpu.memory_space<vmem>>) attributes {dimension_semantics = [#tpu.dimension_semantics<parallel>, #tpu.dimension_semantics<arbitrary>], iteration_bounds = array<i64: 1, 1>, scalar_prefetch = 0 : i64, scratch_operands = 2 : i64, tpu.core_type = #tpu.core_type<tc>, window_params = [{transform_indices = @transform_0, window_bounds = array<i64: 16, 32>}, {pipeline_mode = #tpu.pipeline_mode<synchronous>, transform_indices = @transform_1, window_bounds = array<i64: 1, 32>}, {pipeline_mode = #tpu.pipeline_mode<synchronous>, transform_indices = @transform_2, window_bounds = array<i64: 1, 32>}, {transform_indices = @transform_3, window_bounds = array<i64: 32, 32>}, {transform_indices = @transform_4, window_bounds = array<i64: 32, 32>}, {transform_indices = @transform_5, window_bounds = array<i64: 32, 32>}, {transform_indices = @transform_6, window_bounds = array<i64: 16, 32>}]} {
    %c0_i32 = arith.constant 0 : i32
    %0 = arith.cmpi eq, %arg1, %c0_i32 : i32
    %1 = arith.extui %0 : i1 to i32
    %c0_i32_0 = arith.constant 0 : i32
    %2 = arith.cmpi ne, %1, %c0_i32_0 : i32
    scf.if %2 {
      %c0_17 = arith.constant 0 : index
      %c0_18 = arith.constant 0 : index
      %23 = vector.load %arg2[%c0_17, %c0_18] : memref<16x32xf32, #tpu.memory_space<vmem>>, vector<16x32xf32>
      %cst_19 = arith.constant dense<0.000000e+00> : vector<16xf32>
      %24 = vector.multi_reduction <add>, %23, %cst_19 [1] : vector<16x32xf32> to vector<16xf32>
      %25 = vector.shape_cast %24 : vector<16xf32> to vector<16x1xf32>
      %cst_20 = arith.constant 3.200000e+01 : f32
      %26 = vector.broadcast %cst_20 : f32 to vector<16x1xf32>
      %27 = arith.divf %25, %26 : vector<16x1xf32>
      %28 = vector.broadcast %27 : vector<16x1xf32> to vector<16x32xf32>
      %29 = arith.subf %23, %28 : vector<16x32xf32>
      %30 = arith.mulf %29, %29 : vector<16x32xf32>
      %cst_21 = arith.constant dense<0.000000e+00> : vector<16xf32>
      %31 = vector.multi_reduction <add>, %30, %cst_21 [1] : vector<16x32xf32> to vector<16xf32>
      %32 = vector.shape_cast %31 : vector<16xf32> to vector<16x1xf32>
      %cst_22 = arith.constant 3.200000e+01 : f32
      %33 = vector.broadcast %cst_22 : f32 to vector<16x1xf32>
      %34 = arith.divf %32, %33 : vector<16x1xf32>
      %cst_23 = arith.constant 9.99999974E-6 : f32
      %35 = vector.broadcast %cst_23 : f32 to vector<16x1xf32>
      %36 = arith.addf %34, %35 : vector<16x1xf32>
      %37 = math.rsqrt %36 : vector<16x1xf32>
      %38 = vector.broadcast %37 : vector<16x1xf32> to vector<16x32xf32>
      %39 = arith.mulf %29, %38 : vector<16x32xf32>
      %c0_24 = arith.constant 0 : index
      %c0_25 = arith.constant 0 : index
      %40 = vector.load %arg3[%c0_24, %c0_25] : memref<1x32xf32, #tpu.memory_space<vmem>>, vector<1x32xf32>
      %41 = vector.broadcast %40 : vector<1x32xf32> to vector<16x32xf32>
      %42 = arith.mulf %39, %41 : vector<16x32xf32>
      %c0_26 = arith.constant 0 : index
      %c0_27 = arith.constant 0 : index
      %43 = vector.load %arg4[%c0_26, %c0_27] : memref<1x32xf32, #tpu.memory_space<vmem>>, vector<1x32xf32>
      %44 = vector.broadcast %43 : vector<1x32xf32> to vector<16x32xf32>
      %45 = arith.addf %42, %44 : vector<16x32xf32>
      %c0_28 = arith.constant 0 : index
      %c0_29 = arith.constant 0 : index
      %46 = vector.load %arg9[%c0_28, %c0_29] : memref<16x32xf32, #tpu.memory_space<vmem>>, vector<16x32xf32>
      tpu.vector_store %arg9[%c0_28, %c0_29], %45 {strides = array<i32>} : memref<16x32xf32, #tpu.memory_space<vmem>>, vector<16x32xf32>,
      %cst_30 = arith.constant 0.000000e+00 : f32
      %47 = vector.broadcast %cst_30 : f32 to vector<16x32xf32>
      %c0_31 = arith.constant 0 : index
      %c0_32 = arith.constant 0 : index
      %48 = vector.load %arg10[%c0_31, %c0_32] : memref<16x32xf32, #tpu.memory_space<vmem>>, vector<16x32xf32>
      tpu.vector_store %arg10[%c0_31, %c0_32], %47 {strides = array<i32>} : memref<16x32xf32, #tpu.memory_space<vmem>>, vector<16x32xf32>,
    } else {
    }
    %c0 = arith.constant 0 : index
    %c0_1 = arith.constant 0 : index
    %3 = vector.load %arg9[%c0, %c0_1] : memref<16x32xf32, #tpu.memory_space<vmem>>, vector<16x32xf32>
    %c0_2 = arith.constant 0 : index
    %c0_3 = arith.constant 0 : index
    %4 = vector.load %arg5[%c0_2, %c0_3] : memref<32x32xf32, #tpu.memory_space<vmem>>, vector<32x32xf32>
    %cst = arith.constant dense<0.000000e+00> : vector<16x32xf32>
    %5 = tpu.matmul %3, %4, %cst {dimension_numbers = #tpu.dot_dimension_numbers<[1], [0], [0], [1], [0, 0, 1, 1], [], []>} : vector<16x32xf32>, vector<32x32xf32>, vector<16x32xf32> -> vector<16x32xf32>
    %c0_4 = arith.constant 0 : index
    %c0_5 = arith.constant 0 : index
    %6 = vector.load %arg6[%c0_4, %c0_5] : memref<32x32xf32, #tpu.memory_space<vmem>>, vector<32x32xf32>
    %cst_6 = arith.constant dense<0.000000e+00> : vector<16x32xf32>
    %7 = tpu.matmul %3, %6, %cst_6 {dimension_numbers = #tpu.dot_dimension_numbers<[1], [0], [0], [1], [0, 0, 1, 1], [], []>} : vector<16x32xf32>, vector<32x32xf32>, vector<16x32xf32> -> vector<16x32xf32>
    %8 = arith.negf %7 : vector<16x32xf32>
    %9 = math.exp %8 : vector<16x32xf32>
    %cst_7 = arith.constant 1.000000e+00 : f32
    %10 = vector.broadcast %cst_7 : f32 to vector<16x32xf32>
    %11 = arith.addf %10, %9 : vector<16x32xf32>
    %12 = arith.divf %10, %11 : vector<16x32xf32>
    %13 = arith.mulf %7, %12 : vector<16x32xf32>
    %14 = arith.mulf %5, %13 : vector<16x32xf32>
    %c0_8 = arith.constant 0 : index
    %c0_9 = arith.constant 0 : index
    %15 = vector.load %arg10[%c0_8, %c0_9] : memref<16x32xf32, #tpu.memory_space<vmem>>, vector<16x32xf32>
    %c0_10 = arith.constant 0 : index
    %c0_11 = arith.constant 0 : index
    %16 = vector.load %arg7[%c0_10, %c0_11] : memref<32x32xf32, #tpu.memory_space<vmem>>, vector<32x32xf32>
    %cst_12 = arith.constant dense<0.000000e+00> : vector<16x32xf32>
    %17 = tpu.matmul %14, %16, %cst_12 {dimension_numbers = #tpu.dot_dimension_numbers<[1], [0], [0], [1], [0, 0, 1, 1], [], []>} : vector<16x32xf32>, vector<32x32xf32>, vector<16x32xf32> -> vector<16x32xf32>
    %18 = arith.addf %15, %17 : vector<16x32xf32>
    %c0_13 = arith.constant 0 : index
    %c0_14 = arith.constant 0 : index
    %19 = vector.load %arg10[%c0_13, %c0_14] : memref<16x32xf32, #tpu.memory_space<vmem>>, vector<16x32xf32>
    tpu.vector_store %arg10[%c0_13, %c0_14], %18 {strides = array<i32>} : memref<16x32xf32, #tpu.memory_space<vmem>>, vector<16x32xf32>,
    %c0_i32_15 = arith.constant 0 : i32
    %20 = arith.cmpi eq, %arg1, %c0_i32_15 : i32
    %21 = arith.extui %20 : i1 to i32
    %c0_i32_16 = arith.constant 0 : i32
    %22 = arith.cmpi ne, %21, %c0_i32_16 : i32
    scf.if %22 {
      %c0_17 = arith.constant 0 : index
      %c0_18 = arith.constant 0 : index
      %23 = vector.load %arg10[%c0_17, %c0_18] : memref<16x32xf32, #tpu.memory_space<vmem>>, vector<16x32xf32>
      %c0_19 = arith.constant 0 : index
      %c0_20 = arith.constant 0 : index
      %24 = vector.load %arg8[%c0_19, %c0_20] : memref<16x32xf32, #tpu.memory_space<vmem>>, vector<16x32xf32>
      tpu.vector_store %arg8[%c0_19, %c0_20], %23 {strides = array<i32>} : memref<16x32xf32, #tpu.memory_space<vmem>>, vector<16x32xf32>,
    } else {
    }
    return
  }
  func.func @transform_0(%arg0: i32, %arg1: i32) -> (i32, i32) {
    %c0_i32 = arith.constant 0 : i32
    %c0_i32_0 = arith.constant 0 : i32
    return %arg0, %c0_i32 : i32, i32
  }
  func.func @transform_1(%arg0: i32, %arg1: i32) -> (i32, i32) {
    %c0_i32 = arith.constant 0 : i32
    %c0_i32_0 = arith.constant 0 : i32
    %c0_i32_1 = arith.constant 0 : i32
    return %c0_i32, %c0_i32_0 : i32, i32
  }
  func.func @transform_2(%arg0: i32, %arg1: i32) -> (i32, i32) {
    %c0_i32 = arith.constant 0 : i32
    %c0_i32_0 = arith.constant 0 : i32
    %c0_i32_1 = arith.constant 0 : i32
    return %c0_i32, %c0_i32_0 : i32, i32
  }
  func.func @transform_3(%arg0: i32, %arg1: i32) -> (i32, i32) {
    %c0_i32 = arith.constant 0 : i32
    %c0_i32_0 = arith.constant 0 : i32
    return %c0_i32, %arg1 : i32, i32
  }
  func.func @transform_4(%arg0: i32, %arg1: i32) -> (i32, i32) {
    %c0_i32 = arith.constant 0 : i32
    %c0_i32_0 = arith.constant 0 : i32
    return %c0_i32, %arg1 : i32, i32
  }
  func.func @transform_5(%arg0: i32, %arg1: i32) -> (i32, i32) {
    %c0_i32 = arith.constant 0 : i32
    %c0_i32_0 = arith.constant 0 : i32
    return %arg1, %c0_i32 : i32, i32
  }
  func.func @transform_6(%arg0: i32, %arg1: i32) -> (i32, i32) {
    %c0_i32 = arith.constant 0 : i32
    %c0_i32_0 = arith.constant 0 : i32
    return %arg0, %c0_i32 : i32, i32
  }
}

</mosaic_0001>

<llo_original>
// kernel: tpu_custom_call.1
$region0: #{tpu_custom_call.1}
  #allocation0 [shape = 'u32[]', space=smem, size = 0x4, offset = 0x4, fixed_abs, tag = 'smem constant byte address 0x4 - core index']
  #allocation1 [shape = 'u32[72,128]{1,0:T(1,128)}', space=vmem, size = 0x9000, scoped, tag = 'internal scratch']
  #allocation2 [shape = 'f32[16,32]{1,0:T(8,128)}', space=vmem, size = 0x2000, scoped, tag = 'scratch operand']
  #allocation3 [shape = 'f32[16,32]{1,0:T(8,128)}', space=vmem, size = 0x2000, scoped, tag = 'scratch operand']
  %s0 = inlined_call_operand.hbm [shape: f32[16,32], index: 0, kind: input, shape index: {}]
  %s1 = inlined_call_operand.hbm [shape: f32[1,32], index: 1, kind: input, shape index: {}]
  %s2 = inlined_call_operand.vmem [shape: f32[1,32], index: 2, kind: input, shape index: {}]
  %s3 = inlined_call_operand.hbm [shape: f32[32,32], index: 3, kind: input, shape index: {}]
  %s4 = inlined_call_operand.hbm [shape: f32[32,32], index: 4, kind: input, shape index: {}]
  %s5 = inlined_call_operand.hbm [shape: f32[32,32], index: 5, kind: input, shape index: {}]
  %s6 = inlined_call_operand.hbm [shape: f32[16,32], index: 6, kind: output, shape index: {}]
  %s7 = sld [smem:[#allocation0]]
  $region62: #{tpu_custom_call.1} parent=0
    _
  %s9 = ssub.s32 1, %s7
  %s10 = scalar_select 0, %s9, %s7
  $region1: #{tpu_custom_call.1} parent=0
    #allocation4 [shape = 'u8[8192]{0}', space=vmem, size = 0x2000, scoped, tag = 'input window, operand 0, single buffered']
    #allocation5 [shape = 's32[1]{0}', space=sflag, size = 0x4, scoped, tag = 'scoped memory for tpu_custom_call.1']
    #allocation6 [shape = 's32[1]{0}', space=sflag, size = 0x4, scoped, tag = 'scoped memory for tpu_custom_call.1']
    #allocation7 [shape = 'u8[512]{0}', space=vmem, size = 0x400, scoped, tag = 'input window, operand 1, single buffered']
    #allocation8 [shape = 's32[1]{0}', space=sflag, size = 0x4, scoped, tag = 'scoped memory for tpu_custom_call.1']
    #allocation9 [shape = 'u8[16384]{0}', space=vmem, size = 0x4000, scoped, tag = 'input window, operand 3, single buffered']
    #allocation10 [shape = 'u8[16384]{0}', space=vmem, size = 0x4000, scoped, tag = 'input window, operand 4, single buffered']
    #allocation11 [shape = 's32[1]{0}', space=sflag, size = 0x4, scoped, tag = 'scoped memory for tpu_custom_call.1']
    #allocation12 [shape = 'u8[16384]{0}', space=vmem, size = 0x4000, scoped, tag = 'input window, operand 5, single buffered']
    #allocation13 [shape = 'u8[8192]{0}', space=vmem, size = 0x2000, scoped, tag = 'output window, operand 0, single buffered']
    %11 = vsyncpa [#allocation5], 0
    %12 = vsyncpa [#allocation8], 0
    %13 = vsyncpa [#allocation11], 0
    %14 = vsyncpa [#allocation6], 0
    // Predicated region
    $region2: #{tpu_custom_call.1} parent=1 // pred_check
      _
    $region3: #{tpu_custom_call.1} parent=1 // pred_check_branch
      %16 = sbr.rel (0) target = $region5
    $region4: #{tpu_custom_call.1} parent=1 // pred_region
      %18 = vsyncadd [#allocation5], 0
      %s19 = sshll.u32 %s0, 4
      %s20 = int_to_ptr.hbm [resolvable:$true] %s19
      %s21 = sshll.u32 [#allocation4], 4
      %s22 = int_to_ptr.vmem [resolvable:$true] %s21
      %27 = dma.hbm_to_vmem [thread:$0]  %s20, 256, %s22, [#allocation5], 128, 128, 8
    $region5: #{tpu_custom_call.1} parent=1 // pred_fallthru
      _
    // Predicated region
    $region6: #{tpu_custom_call.1} parent=1 // pred_check
      _
    $region7: #{tpu_custom_call.1} parent=1 // pred_check_branch
      %29 = sbr.rel (0) target = $region9
    $region8: #{tpu_custom_call.1} parent=1 // pred_region
      %31 = vsyncadd [#allocation8], 0
      %s33 = sshll.u32 %s1, 4
      %s34 = int_to_ptr.hbm [resolvable:$true] %s33
      %s35 = sshll.u32 [#allocation7], 4
      %s36 = int_to_ptr.vmem [resolvable:$true] %s35
      %38 = dma.hbm_to_vmem [thread:$0]  %s34, 16, %s36, [#allocation8]
    $region9: #{tpu_custom_call.1} parent=1 // pred_fallthru
      _
    // Predicated region
    $region10: #{tpu_custom_call.1} parent=1 // pred_check
      _
    $region11: #{tpu_custom_call.1} parent=1 // pred_check_branch
      %40 = sbr.rel (0) target = $region13
    $region12: #{tpu_custom_call.1} parent=1 // pred_region
      _
    $region13: #{tpu_custom_call.1} parent=1 // pred_fallthru
      _
    // Predicated region
    $region14: #{tpu_custom_call.1} parent=1 // pred_check
      _
    $region15: #{tpu_custom_call.1} parent=1 // pred_check_branch
      %42 = sbr.rel (0) target = $region17
    $region16: #{tpu_custom_call.1} parent=1 // pred_region
      %44 = vsyncadd [#allocation8], 0
      %s45 = sshll.u32 %s3, 4
      %s46 = int_to_ptr.hbm [resolvable:$true] %s45
      %s47 = sshll.u32 [#allocation9], 4
      %s48 = int_to_ptr.vmem [resolvable:$true] %s47
      %53 = dma.hbm_to_vmem [thread:$0]  %s46, 512, %s48, [#allocation8], 128, 128, 8
    $region17: #{tpu_custom_call.1} parent=1 // pred_fallthru
      _
    // Predicated region
    $region18: #{tpu_custom_call.1} parent=1 // pred_check
      _
    $region19: #{tpu_custom_call.1} parent=1 // pred_check_branch
      %55 = sbr.rel (0) target = $region21
    $region20: #{tpu_custom_call.1} parent=1 // pred_region
      %57 = vsyncadd [#allocation11], 0
      %s58 = sshll.u32 %s4, 4
      %s59 = int_to_ptr.hbm [resolvable:$true] %s58
      %s60 = sshll.u32 [#allocation10], 4
      %s61 = int_to_ptr.vmem [resolvable:$true] %s60
      %66 = dma.hbm_to_vmem [thread:$0]  %s59, 512, %s61, [#allocation11], 128, 128, 8
    $region21: #{tpu_custom_call.1} parent=1 // pred_fallthru
      _
    // Predicated region
    $region22: #{tpu_custom_call.1} parent=1 // pred_check
      _
    $region23: #{tpu_custom_call.1} parent=1 // pred_check_branch
      %68 = sbr.rel (0) target = $region25
    $region24: #{tpu_custom_call.1} parent=1 // pred_region
      %70 = vsyncadd [#allocation11], 0
      %s71 = sshll.u32 %s5, 4
      %s72 = int_to_ptr.hbm [resolvable:$true] %s71
      %s73 = sshll.u32 [#allocation12], 4
      %s74 = int_to_ptr.vmem [resolvable:$true] %s73
      %79 = dma.hbm_to_vmem [thread:$0]  %s72, 512, %s74, [#allocation11], 128, 128, 8
    $region25: #{tpu_custom_call.1} parent=1 // pred_fallthru
      _
    // Predicated region
    $region26: #{tpu_custom_call.1} parent=1 // pred_check
      _
    $region27: #{tpu_custom_call.1} parent=1 // pred_check_branch
      %81 = sbr.rel (0) target = $region29
    $region28: #{tpu_custom_call.1} parent=1 // pred_region
      %83 = dma.done [#allocation5], 256
    $region29: #{tpu_custom_call.1} parent=1 // pred_fallthru
      _
    // Predicated region
    $region30: #{tpu_custom_call.1} parent=1 // pred_check
      _
    $region31: #{tpu_custom_call.1} parent=1 // pred_check_branch
      %85 = sbr.rel (0) target = $region33
    $region32: #{tpu_custom_call.1} parent=1 // pred_region
      %87 = dma.done [#allocation8], 16
    $region33: #{tpu_custom_call.1} parent=1 // pred_fallthru
      _
    // Predicated region
    $region34: #{tpu_custom_call.1} parent=1 // pred_check
      _
    $region35: #{tpu_custom_call.1} parent=1 // pred_check_branch
      %89 = sbr.rel (0) target = $region37
    $region36: #{tpu_custom_call.1} parent=1 // pred_region
      %91 = dma.done [#allocation8], 512
    $region37: #{tpu_custom_call.1} parent=1 // pred_fallthru
      _
    // Predicated region
    $region38: #{tpu_custom_call.1} parent=1 // pred_check
      _
    $region39: #{tpu_custom_call.1} parent=1 // pred_check_branch
      %93 = sbr.rel (0) target = $region41
    $region40: #{tpu_custom_call.1} parent=1 // pred_region
      %95 = dma.done [#allocation11], 512
    $region41: #{tpu_custom_call.1} parent=1 // pred_fallthru
      _
    // Predicated region
    $region42: #{tpu_custom_call.1} parent=1 // pred_check
      _
    $region43: #{tpu_custom_call.1} parent=1 // pred_check_branch
      %97 = sbr.rel (0) target = $region45
    $region44: #{tpu_custom_call.1} parent=1 // pred_region
      %99 = dma.done [#allocation11], 512
    $region45: #{tpu_custom_call.1} parent=1 // pred_fallthru
      _
    %p100 = scmp.eq.s32.totalorder 0, 0
    // Predicated region
    $region46: #{tpu_custom_call.1} parent=1 // pred_check
      %p101 = pneg %p100
    $region47: #{tpu_custom_call.1} parent=1 // pred_check_branch
      %103 = sbr.rel (%p101) target = $region49
    $region48: #{tpu_custom_call.1} parent=1 // pred_region
      %v104 = vld [vmem:[#allocation4] sm:$0xff]
      %v105 = vld [vmem:[#allocation4 + $0x8] sm:$0xff]
      %vm106 = vcmask 261120
      %v107 = vsel %vm106, %v104, 0.0
      %108 = vadd.xlane.f32.xlu0 %v107
      %v109 = vpop.xlane.xlu0 %108
      %v110 = vsel %vm106, %v105, 0.0
      %111 = vadd.xlane.f32.xlu0 %v110
      %v112 = vpop.xlane.xlu0 %111
      %v113 = vrcp.pop 32.0
      %v114 = vmul.f32 32.0, %v113
      %v115 = vsub.f32 1.0, %v114
      %v116 = vmul.f32 %v113, %v115
      %v117 = vadd.f32 %v113, %v116
      %vm118 = vweird.f32 %v113
      %v119 = vsel %vm118, %v113, %v117
      %v120 = vmul.f32 %v109, %v119
      %v121 = vmul.f32 %v112, %v119
      %v122 = vsub.f32 %v104, %v120
      %v123 = vsub.f32 %v105, %v121
      %v124 = vmul.f32 %v122, %v122
      %v125 = vmul.f32 %v123, %v123
      %v126 = vsel %vm106, %v124, 0.0
      %127 = vadd.xlane.f32.xlu0 %v126
      %v128 = vpop.xlane.xlu0 %127
      %v129 = vsel %vm106, %v125, 0.0
      %130 = vadd.xlane.f32.xlu0 %v129
      %v131 = vpop.xlane.xlu0 %130
      %v132 = vmul.f32 %v128, %v119
      %v133 = vmul.f32 %v131, %v119
      %v134 = vadd.f32 %v132, 1e-05
      %v135 = vadd.f32 %v133, 1e-05
      %v136 = vrsqrt.pop %v134
      %v137 = vmul.f32 %v136, %v134
      %v138 = vmul.f32 %v137, %v136
      %v139 = vmul.f32 0.5, %v138
      %v140 = vsub.f32 1.5, %v139
      %v141 = vmul.f32 %v136, %v140
      %vm142 = vweird.f32 %v134
      %vm143 = vweird.f32 %v136
      %vm144 = vmor %vm142, %vm143
      %v145 = vsel %vm144, %v136, %v141
      %v146 = vrsqrt.pop %v135
      %v147 = vmul.f32 %v146, %v135
      %v148 = vmul.f32 %v147, %v146
      %v149 = vmul.f32 0.5, %v148
      %v150 = vsub.f32 1.5, %v149
      %v151 = vmul.f32 %v146, %v150
      %vm152 = vweird.f32 %v135
      %vm153 = vweird.f32 %v146
      %vm154 = vmor %vm152, %vm153
      %v155 = vsel %vm154, %v146, %v151
      %v156 = vmul.f32 %v122, %v145
      %v157 = vmul.f32 %v123, %v155
      %v158 = vld [vmem:[#allocation7] sm:$0x1]
      %v160 = vperm.slane %v158, 0
      %v162 = vmul.f32 %v156, %v160
      %v163 = vmul.f32 %v157, %v160
      %v164 = vld [vmem:[%s2] sm:$0x1]
      %v166 = vperm.slane %v164, 0
      %v168 = vadd.f32 %v162, %v166
      %v169 = vadd.f32 %v163, %v166
      %170 = vst.msk [vmem:[#allocation2] sm:$0xff] %vm106, %v168
      %171 = vst.msk [vmem:[#allocation2 + $0x8] sm:$0xff] %vm106, %v169
      %172 = vst.msk [vmem:[#allocation3] sm:$0xff] %vm106, 0.0
      %173 = vst.msk [vmem:[#allocation3 + $0x8] sm:$0xff] %vm106, 0.0
    $region49: #{tpu_custom_call.1} parent=1 // pred_fallthru
      _
    %v174 = vld [vmem:[#allocation2] sm:$0xff]
    %v175 = vld [vmem:[#allocation2 + $0x8] sm:$0xff]
    %v176 = vld [vmem:[#allocation9] sm:$0xff]
    %v177 = vld [vmem:[#allocation9 + $0x8] sm:$0xff]
    %v178 = vld [vmem:[#allocation9 + $0x10] sm:$0xff]
    %v179 = vld [vmem:[#allocation9 + $0x18] sm:$0xff]
    %vm180 = vcmask 261120
    %v182 = vsel %vm180, %v174, 0
    %v185 = vsel %vm180, %v175, 0
    %187 = vmatpush.msra.mxu0 0.0
    %188 = vmatpush.msra.mxu0 0.0
    %189 = vmatpush.msra.mxu0 0.0
    %190 = vmatpush.msra.mxu0 0.0
    %191 = vmatpush.msra.mxu0 0.0
    %192 = vmatpush.msra.mxu0 0.0
    %193 = vmatpush.msra.mxu0 0.0
    %194 = vmatpush.msra.mxu0 0.0
    %195 = vmatpush.msra.mxu0 0.0
    %196 = vmatpush.msra.mxu0 0.0
    %197 = vmatpush.msra.mxu0 0.0
    %198 = vmatpush.msra.mxu0 0.0
    %199 = vmatpush.msra.mxu0 %v179
    %200 = vmatpush.msra.mxu0 %v178
    %201 = vmatpush.msra.mxu0 %v177
    %202 = vmatpush.msra.mxu0 %v176
    %203 = vmatmul.f32.gmra.mxu0 %v182
    %v204 = vpop.f32.mrf.mxu0
    %v205 = vadd.f32 0.0, %v204
    %206 = vmatmul.f32.gmra.mxu0 %v185
    %v207 = vpop.f32.mrf.mxu0
    %v208 = vadd.f32 0.0, %v207
    %209 = vdwg.mxu0
    %v210 = vld [vmem:[#allocation10] sm:$0xff]
    %v211 = vld [vmem:[#allocation10 + $0x8] sm:$0xff]
    %v212 = vld [vmem:[#allocation10 + $0x10] sm:$0xff]
    %v213 = vld [vmem:[#allocation10 + $0x18] sm:$0xff]
    %214 = vmatpush.msra.mxu0 0.0
    %215 = vmatpush.msra.mxu0 0.0
    %216 = vmatpush.msra.mxu0 0.0
    %217 = vmatpush.msra.mxu0 0.0
    %218 = vmatpush.msra.mxu0 0.0
    %219 = vmatpush.msra.mxu0 0.0
    %220 = vmatpush.msra.mxu0 0.0
    %221 = vmatpush.msra.mxu0 0.0
    %222 = vmatpush.msra.mxu0 0.0
    %223 = vmatpush.msra.mxu0 0.0
    %224 = vmatpush.msra.mxu0 0.0
    %225 = vmatpush.msra.mxu0 0.0
    %226 = vmatpush.msra.mxu0 %v213
    %227 = vmatpush.msra.mxu0 %v212
    %228 = vmatpush.msra.mxu0 %v211
    %229 = vmatpush.msra.mxu0 %v210
    %230 = vmatmul.f32.gmra.mxu0 %v182
    %v231 = vpop.f32.mrf.mxu0
    %v232 = vadd.f32 0.0, %v231
    %233 = vmatmul.f32.gmra.mxu0 %v185
    %v234 = vpop.f32.mrf.mxu0
    %v235 = vadd.f32 0.0, %v234
    %236 = vdwg.mxu0
    %v237 = vxor.u32 %v232, 2147483648
    %v238 = vxor.u32 %v235, 2147483648
    %v239 = vmul.f32 %v237, 1.442695
    %v240 = vpow.pop %v239
    %v241 = vmul.f32 %v238, 1.442695
    %v242 = vpow.pop %v241
    %v243 = vadd.f32 %v240, 1.0
    %v244 = vadd.f32 %v242, 1.0
    %v245 = vrcp.pop %v243
    %v246 = vmul.f32 %v243, %v245
    %v247 = vsub.f32 1.0, %v246
    %v248 = vmul.f32 %v245, %v247
    %v249 = vadd.f32 %v245, %v248
    %vm250 = vweird.f32 %v243
    %vm251 = vweird.f32 %v245
    %vm252 = vmor %vm250, %vm251
    %v253 = vsel %vm252, %v245, %v249
    %v254 = vand.u32 2147483647, %v243
    %vm255 = vcmp.eq.f32.partialorder %v254, 8.507059e+37
    %v256 = vand.u32 %v243, 2147483648
    %v257 = vor.u32 1.1754944e-38, %v256
    %v258 = vsel %vm255, %v257, %v253
    %v259 = vmul.f32 1.0, %v258
    %v260 = vrcp.pop %v244
    %v261 = vmul.f32 %v244, %v260
    %v262 = vsub.f32 1.0, %v261
    %v263 = vmul.f32 %v260, %v262
    %v264 = vadd.f32 %v260, %v263
    %vm265 = vweird.f32 %v244
    %vm266 = vweird.f32 %v260
    %vm267 = vmor %vm265, %vm266
    %v268 = vsel %vm267, %v260, %v264
    %v269 = vand.u32 2147483647, %v244
    %vm270 = vcmp.eq.f32.partialorder %v269, 8.507059e+37
    %v271 = vand.u32 %v244, 2147483648
    %v272 = vor.u32 1.1754944e-38, %v271
    %v273 = vsel %vm270, %v272, %v268
    %v274 = vmul.f32 1.0, %v273
    %v275 = vmul.f32 %v232, %v259
    %v276 = vmul.f32 %v235, %v274
    %v277 = vmul.f32 %v205, %v275
    %v278 = vmul.f32 %v208, %v276
    %v279 = vld [vmem:[#allocation3] sm:$0xff]
    %v280 = vld [vmem:[#allocation3 + $0x8] sm:$0xff]
    %v281 = vld [vmem:[#allocation12] sm:$0xff]
    %v282 = vld [vmem:[#allocation12 + $0x8] sm:$0xff]
    %v283 = vld [vmem:[#allocation12 + $0x10] sm:$0xff]
    %v284 = vld [vmem:[#allocation12 + $0x18] sm:$0xff]
    %v286 = vsel %vm180, %v277, 0
    %v289 = vsel %vm180, %v278, 0
    %291 = vmatpush.msra.mxu0 0.0
    %292 = vmatpush.msra.mxu0 0.0
    %293 = vmatpush.msra.mxu0 0.0
    %294 = vmatpush.msra.mxu0 0.0
    %295 = vmatpush.msra.mxu0 0.0
    %296 = vmatpush.msra.mxu0 0.0
    %297 = vmatpush.msra.mxu0 0.0
    %298 = vmatpush.msra.mxu0 0.0
    %299 = vmatpush.msra.mxu0 0.0
    %300 = vmatpush.msra.mxu0 0.0
    %301 = vmatpush.msra.mxu0 0.0
    %302 = vmatpush.msra.mxu0 0.0
    %303 = vmatpush.msra.mxu0 %v284
    %304 = vmatpush.msra.mxu0 %v283
    %305 = vmatpush.msra.mxu0 %v282
    %306 = vmatpush.msra.mxu0 %v281
    %307 = vmatmul.f32.gmra.mxu0 %v286
    %v308 = vpop.f32.mrf.mxu0
    %v309 = vadd.f32 0.0, %v308
    %310 = vmatmul.f32.gmra.mxu0 %v289
    %v311 = vpop.f32.mrf.mxu0
    %v312 = vadd.f32 0.0, %v311
    %313 = vdwg.mxu0
    %v314 = vadd.f32 %v279, %v309
    %v315 = vadd.f32 %v280, %v312
    %316 = vst.msk [vmem:[#allocation3] sm:$0xff] %vm180, %v314
    %317 = vst.msk [vmem:[#allocation3 + $0x8] sm:$0xff] %vm180, %v315
    // Predicated region
    $region50: #{tpu_custom_call.1} parent=1 // pred_check
      %p318 = pneg %p100
    $region51: #{tpu_custom_call.1} parent=1 // pred_check_branch
      %320 = sbr.rel (%p318) target = $region53
    $region52: #{tpu_custom_call.1} parent=1 // pred_region
      %v321 = vld [vmem:[#allocation3] sm:$0xff]
      %v322 = vld [vmem:[#allocation3 + $0x8] sm:$0xff]
      %323 = vst.msk [vmem:[#allocation13] sm:$0xff] %vm180, %v321
      %324 = vst.msk [vmem:[#allocation13 + $0x8] sm:$0xff] %vm180, %v322
    $region53: #{tpu_custom_call.1} parent=1 // pred_fallthru
      _
    // Predicated region
    $region54: #{tpu_custom_call.1} parent=1 // pred_check
      _
    $region55: #{tpu_custom_call.1} parent=1 // pred_check_branch
      %326 = sbr.rel (0) target = $region57
    $region56: #{tpu_custom_call.1} parent=1 // pred_region
      %328 = vsyncadd [#allocation6], 0
      %s329 = sshll.u32 [#allocation13], 4
      %s330 = int_to_ptr.vmem [resolvable:$true] %s329
      %s331 = sshll.u32 %s6, 4
      %s332 = int_to_ptr.hbm [resolvable:$true] %s331
      %337 = dma.vmem_to_hbm [thread:$0]  %s330, 256, %s332, [#allocation6], 128, 128, 8
    $region57: #{tpu_custom_call.1} parent=1 // pred_fallthru
      _
    // Predicated region
    $region58: #{tpu_custom_call.1} parent=1 // pred_check
      _
    $region59: #{tpu_custom_call.1} parent=1 // pred_check_branch
      %339 = sbr.rel (0) target = $region61
    $region60: #{tpu_custom_call.1} parent=1 // pred_region
      %341 = dma.done [#allocation6], 256
    $region61: #{tpu_custom_call.1} parent=1 // pred_fallthru
      _
    %342 = vsyncpa [#allocation5], 1
    %343 = vsyncpa [#allocation8], 1
    %344 = vsyncpa [#allocation11], 1
    %345 = vsyncpa [#allocation6], 1

</llo_original>
